<compile_context>
chip_gen: v7x
topology: tpu7x:2x2x1
jax: 0.10.0
libtpu: 0.0.40
codegen_flags: <defaults>
</compile_context>

<pallas_src>
import functools

import jax
import jax.numpy as jnp
from jax.experimental import pallas as pl
from jax.experimental.pallas import tpu as pltpu

_LANE = 128                      # TPU lane width: feature dims padded to this
_TM_TARGET = 256                 # default dst-node tile (sublane axis, 8-aligned)
_TK_TARGET = 1024                # default src-node tile (reduction axis, 128-aligned)
_FUSED_VMEM_BUDGET = 12 * 2**20  # conservative whole-net-in-VMEM budget (all gens)


# ---------------------------------------------------------------------------
# helpers
# ---------------------------------------------------------------------------
def _round_up(n, m):
    return ((n + m - 1) // m) * m


def _pad2(a, rows, cols):
    return jnp.pad(a, ((0, rows - a.shape[0]), (0, cols - a.shape[1])))


def _pick_tm(n_dst, tm_target):
    """8-aligned dst tile; keep >=2 dst blocks when possible (megacore / v7x)."""
    n8 = _round_up(n_dst, 8)
    tm = min(tm_target, n8)
    if n8 > 8:
        tm = min(tm, _round_up((n8 + 1) // 2, 8))
    return max(tm, 8)


def _pick_tk(n_src, tk_target):
    """128-aligned src (reduction) tile."""
    return max(min(tk_target, _round_up(n_src, _LANE)), _LANE)


def _prepare_params(params):
    """Zero-pad feature dims to 128 lanes; keep W_self / W_neigh separate."""
    prepped = []
    for w_self, w_neigh, b in params:
        fi, fo = w_self.shape
        fip, fop = _round_up(fi, _LANE), _round_up(fo, _LANE)
        ws = _pad2(w_self, fip, fop)
        wn = _pad2(w_neigh, fip, fop)
        bias = jnp.pad(b.astype(jnp.float32), (0, fop - fo)).reshape(1, fop)
        prepped.append((ws, wn, bias, fip, fop))
    return prepped


# ---------------------------------------------------------------------------
# tiled single-layer kernel:  grid = (N_dst/tm, N_src/tk)
# ---------------------------------------------------------------------------
def _sage_layer_tiled_kernel(a_ref, invdeg_ref, hsrc_ref, hdst_ref,
                             ws_ref, wn_ref, b_ref, o_ref, acc_ref,
                             *, apply_relu):
    """One SAGEConv('mean') layer, tiled over dst nodes (i) and src nodes (k).

    a_ref      : (tm, tk)       exact 0/1 adjacency tile (bf16 -> MXU fast path)
    invdeg_ref : (tm, 1)        per-dst-row 1/deg (f32)
    hsrc_ref   : (tk, F_in)     src-feature tile (reduction operand, bf16)
    hdst_ref   : (tm, F_in)     dst-feature tile (same HBM array as h_src)
    ws_ref     : (F_in, F_out)  W_self
    wn_ref     : (F_in, F_out)  W_neigh
    b_ref      : (1, F_out)     bias (f32)
    o_ref      : (tm, F_out)
    acc_ref    : (tm, F_in) f32 neighbor-sum accumulator (scaled by 1/deg at end)
    """
    k = pl.program_id(1)

    @pl.when(k == 0)
    def _init():
        acc_ref[...] = jnp.zeros_like(acc_ref)

    # neighbor sum: accumulate A_tile @ h_src_tile over src tiles (bf16 MXU).
    acc_ref[...] += jnp.dot(a_ref[...], hsrc_ref[...],
                            preferred_element_type=jnp.float32)

    @pl.when(k == pl.num_programs(1) - 1)
    def _finalize():
        h_neigh = acc_ref[...] * invdeg_ref[...]          # f32 mean, no downcast
        out = jnp.dot(hdst_ref[...], ws_ref[...],
                      preferred_element_type=jnp.float32)
        out += jnp.dot(h_neigh, wn_ref[...].astype(jnp.float32),
                       preferred_element_type=jnp.float32)
        out += b_ref[...]
        if apply_relu:
            out = jnp.maximum(out, 0.0)
        o_ref[...] = out.astype(o_ref.dtype)


def sage_conv_tiled(adj01, inv_deg, h_src, w_self, w_neigh, bias, *,
                    apply_relu, out_dtype=jnp.float32,
                    feat_dtype=jnp.bfloat16, adj_dtype=jnp.bfloat16,
                    tm_target=_TM_TARGET, tk_target=_TK_TARGET):
    """One SAGEConv('mean') layer as a tiled, pipelined Pallas call.

    adj01   : (N_dst, N_src) dense 0/1 adjacency (unnormalized)
    inv_deg : (N_dst,)       1 / max(in-degree, 1), f32
    h_src   : (N_src, F_in)  features (F_in already 128-lane padded)
    """
    n_dst, n_src = adj01.shape
    f_in = h_src.shape[1]
    f_out = w_self.shape[1]
    assert w_self.shape == (f_in, f_out) and w_neigh.shape == (f_in, f_out)
    assert f_in % _LANE == 0 and f_out % _LANE == 0

    tm = _pick_tm(n_dst, tm_target)
    tk = _pick_tk(n_src, tk_target)
    n_dst_p = _round_up(n_dst, tm)
    # h_src is also read through the dst BlockSpec -> must cover n_dst_p rows.
    n_src_p = max(_round_up(n_src, tk), _round_up(n_dst_p, tk))
    grid = (n_dst_p // tm, n_src_p // tk)

    a_p = _pad2(adj01.astype(adj_dtype), n_dst_p, n_src_p)
    inv_p = jnp.pad(inv_deg.astype(jnp.float32).reshape(-1, 1),
                    ((0, n_dst_p - n_dst), (0, 0)), constant_values=1.0)
    h_p = _pad2(h_src.astype(feat_dtype), n_src_p, f_in)
    ws = w_self.astype(feat_dtype)
    wn = w_neigh.astype(feat_dtype)
    b2 = bias.astype(jnp.float32).reshape(1, f_out)

    kernel = functools.partial(_sage_layer_tiled_kernel, apply_relu=apply_relu)
    out = pl.pallas_call(
        kernel,
        out_shape=jax.ShapeDtypeStruct((n_dst_p, f_out), out_dtype),
        grid_spec=pltpu.PrefetchScalarGridSpec(
            num_scalar_prefetch=0,
            grid=grid,
            in_specs=[
                pl.BlockSpec((tm, tk), lambda i, k: (i, k)),          # A (0/1)
                pl.BlockSpec((tm, 1), lambda i, k: (i, 0)),           # 1/deg
                pl.BlockSpec((tk, f_in), lambda i, k: (k, 0)),        # src feats
                pl.BlockSpec((tm, f_in), lambda i, k: (i, 0)),        # dst feats
                pl.BlockSpec((f_in, f_out), lambda i, k: (0, 0)),     # W_self
                pl.BlockSpec((f_in, f_out), lambda i, k: (0, 0)),     # W_neigh
                pl.BlockSpec((1, f_out), lambda i, k: (0, 0)),        # bias
            ],
            out_specs=pl.BlockSpec((tm, f_out), lambda i, k: (i, 0)),
            scratch_shapes=[pltpu.VMEM((tm, f_in), jnp.float32)],
        ),
        compiler_params=pltpu.CompilerParams(
            dimension_semantics=("parallel", "arbitrary")),
        # NOTE: dst features are the SAME array as h_src (no host-side slice /
        # duplicate HBM materialization) viewed through a second BlockSpec.
    )(a_p, inv_p, h_p, h_p, ws, wn, b2)
    return out[:n_dst]


# ---------------------------------------------------------------------------
# fused two-layer kernel (whole network in one pallas_call, small shapes)
# ---------------------------------------------------------------------------
def _sage_fused_kernel(a1_ref, inv1_ref, a2_ref, inv2_ref, x_ref,
                       ws1_ref, wn1_ref, b1_ref, ws2_ref, wn2_ref, b2_ref,
                       o_ref, *, n_dst1, n_dst2):
    """Both SAGE layers in one kernel; the intermediate activation stays in VMEM."""
    x = x_ref[...]
    # ---- layer 1: relu(x_dst @ Ws1 + (1/deg1)*(A1 @ x) @ Wn1 + b1) ----
    h_neigh1 = jnp.dot(a1_ref[...], x, preferred_element_type=jnp.float32)
    h_neigh1 = h_neigh1 * inv1_ref[...]
    h1 = jnp.dot(x[:n_dst1], ws1_ref[...], preferred_element_type=jnp.float32)
    h1 += jnp.dot(h_neigh1, wn1_ref[...].astype(jnp.float32),
                  preferred_element_type=jnp.float32)
    h1 = jnp.maximum(h1 + b1_ref[...], 0.0)
    h1_c = h1.astype(x.dtype)                      # narrow MXU feed for layer 2
    # ---- layer 2: h1_dst @ Ws2 + (1/deg2)*(A2 @ h1) @ Wn2 + b2 ----
    h_neigh2 = jnp.dot(a2_ref[...], h1_c, preferred_element_type=jnp.float32)
    h_neigh2 = h_neigh2 * inv2_ref[...]
    out = jnp.dot(h1_c[:n_dst2], ws2_ref[...], preferred_element_type=jnp.float32)
    out += jnp.dot(h_neigh2, wn2_ref[...].astype(jnp.float32),
                   preferred_element_type=jnp.float32)
    o_ref[...] = (out + b2_ref[...]).astype(o_ref.dtype)


def _fused_vmem_bytes(n0p, n1p, n2p, f0, f1, f2, feat_bytes, adj_bytes):
    """Conservative fused-kernel footprint incl. intermediates."""
    b = adj_bytes * (n1p * n0p + n2p * n1p)                    # A1, A2
    b += 4 * (n1p + n2p)                                       # inv_deg vectors
    b += feat_bytes * (n0p * f0 + 2 * f0 * f1 + 2 * f1 * f2)   # x, weights
    b += 4 * (f1 + f2)                                         # biases
    b += 4 * n1p * f0                                          # h_neigh1 (f32)
    b += (4 + feat_bytes) * n1p * f1                           # h1 f32 + narrow copy
    b += 4 * n2p * f1                                          # h_neigh2 (f32)
    b += 4 * n2p * f2 * 3                                      # layer-2 partials + out
    return b


def sage_forward_fused(adj1, inv1, adj2, inv2, x_p, p1, p2, *,
                       feat_dtype=jnp.bfloat16, adj_dtype=jnp.bfloat16):
    """Both layers in a single pallas_call (full blocks resident in VMEM)."""
    ws1, wn1, b1, f0, f1 = p1
    ws2, wn2, b2, f1b, f2 = p2
    n1, n0 = adj1.shape
    n2 = adj2.shape[0]
    assert adj2.shape[1] == n1 and f1b == f1
    assert n1 <= n0 and n2 <= n1, "DGL block: dst nodes are a prefix of src nodes"
    n0p, n1p, n2p = _round_up(n0, 8), _round_up(n1, 8), _round_up(n2, 8)

    a1 = _pad2(adj1.astype(adj_dtype), n1p, n0p)
    a2 = _pad2(adj2.astype(adj_dtype), n2p, n1p)
    i1 = jnp.pad(inv1.astype(jnp.float32).reshape(-1, 1),
                 ((0, n1p - n1), (0, 0)), constant_values=1.0)
    i2 = jnp.pad(inv2.astype(jnp.float32).reshape(-1, 1),
                 ((0, n2p - n2), (0, 0)), constant_values=1.0)
    xc = _pad2(x_p.astype(feat_dtype), n0p, f0)

    def full(shape):
        return pl.BlockSpec(shape, lambda: (0,) * len(shape))

    kernel = functools.partial(_sage_fused_kernel, n_dst1=n1p, n_dst2=n2p)
    out = pl.pallas_call(
        kernel,
        out_shape=jax.ShapeDtypeStruct((n2p, f2), jnp.float32),
        in_specs=[full((n1p, n0p)), full((n1p, 1)),
                  full((n2p, n1p)), full((n2p, 1)),
                  full((n0p, f0)),
                  full((f0, f1)), full((f0, f1)), full((1, f1)),
                  full((f1, f2)), full((f1, f2)), full((1, f2))],
        out_specs=full((n2p, f2)),
    )(a1, i1, a2, i2, xc,
      ws1.astype(feat_dtype), wn1.astype(feat_dtype), b1,
      ws2.astype(feat_dtype), wn2.astype(feat_dtype), b2)
    return out[:n2]


# ---------------------------------------------------------------------------
# top-level forward (equivalent of SAGE.forward(blocks, x), eval mode)
# ---------------------------------------------------------------------------
def sage_forward(blocks, x, params, *, fuse_layers=None,
                 feat_dtype=jnp.bfloat16, adj_dtype=jnp.bfloat16,
                 tm_target=_TM_TARGET, tk_target=_TK_TARGET):
    """blocks: dense 0/1 adjacencies (dst x src, UNNORMALIZED); x: (N0, in_size);
    params: list of (W_self, W_neigh, bias) per layer."""
    assert len(blocks) == len(params)
    out_size = params[-1][0].shape[1]
    prepped = _prepare_params(params)
    x_p = _pad2(x, x.shape[0], prepped[0][3])   # pad features to 128 lanes

    # per-dst-row 1/deg; adjacency itself stays exact 0/1 in a narrow dtype.
    inv_degs = [1.0 / jnp.maximum(b.sum(axis=1), 1.0) for b in blocks]

    if fuse_layers is None:
        fuse_layers = False
        if len(blocks) == 2:
            n1, n0 = blocks[0].shape
            n2 = blocks[1].shape[0]
            fuse_layers = _fused_vmem_bytes(
                _round_up(n0, 8), _round_up(n1, 8), _round_up(n2, 8),
                prepped[0][3], prepped[0][4], prepped[1][4],
                jnp.dtype(feat_dtype).itemsize,
                jnp.dtype(adj_dtype).itemsize) <= _FUSED_VMEM_BUDGET

    if fuse_layers:
        assert len(blocks) == 2
        out = sage_forward_fused(
            blocks[0], inv_degs[0], blocks[1], inv_degs[1], x_p,
            prepped[0], prepped[1],
            feat_dtype=feat_dtype, adj_dtype=adj_dtype)
    else:
        h = x_p
        n_layers = len(blocks)
        for l, (adj, inv_deg, (ws, wn, b2, fip, _)) in enumerate(
                zip(blocks, inv_degs, prepped)):
            assert h.shape[1] == fip
            last = (l == n_layers - 1)
            h = sage_conv_tiled(
                adj, inv_deg, h, ws, wn, b2,
                apply_relu=not last,
                out_dtype=jnp.float32 if last else feat_dtype,
                feat_dtype=feat_dtype, adj_dtype=adj_dtype,
                tm_target=tm_target, tk_target=tk_target)
        out = h
    return out[:, :out_size]


# ---------------------------------------------------------------------------
# demo / correctness check
# ---------------------------------------------------------------------------
def _init_linear(key, f_in, f_out):
    bound = 1.0 / jnp.sqrt(jnp.float32(f_in))
    return jax.random.uniform(key, (f_in, f_out), jnp.float32, -bound, bound)


if __name__ == "__main__":
    key = jax.random.PRNGKey(0)

    in_size, hid_size, out_size = 16, 32, 8
    n0, n1, n2 = 256, 128, 64          # layer-1 src nodes, layer-1 dst, layer-2 dst

    k = jax.random.split(key, 8)
    x = jax.random.normal(k[0], (n0, in_size), jnp.float32)
    adj1 = (jax.random.uniform(k[1], (n1, n0)) < 0.10).astype(jnp.float32)
    adj2 = (jax.random.uniform(k[2], (n2, n1)) < 0.10).astype(jnp.float32)
    blocks = [adj1, adj2]              # raw 0/1; mean normalization is in-kernel

    params = [
        (_init_linear(k[3], in_size, hid_size),
         _init_linear(k[4], in_size, hid_size),
         jnp.zeros((hid_size,), jnp.float32)),
        (_init_linear(k[5], hid_size, out_size),
         _init_linear(k[6], hid_size, out_size),
         jnp.zeros((out_size,), jnp.float32)),
    ]

    # pure-JAX reference (DGL SAGEConv 'mean' semantics)
    def ref_layer(adj, h, w_s, w_n, b, relu):
        deg = jnp.maximum(adj.sum(axis=1, keepdims=True), 1.0)
        o = h[: adj.shape[0]] @ w_s + ((adj / deg) @ h) @ w_n + b
        return jnp.maximum(o, 0.0) if relu else o

    ref = ref_layer(blocks[0], x, *params[0], True)
    ref = ref_layer(blocks[1], ref, *params[1], False)

    # 1) tiled per-layer kernels, exact f32 feeds (bf16 0/1 adjacency is exact),
    #    small tiles to exercise a real (dst, src) grid (2x2 on layer 1)
    out_f32 = jax.block_until_ready(
        sage_forward(blocks, x, params, fuse_layers=False,
                     feat_dtype=jnp.float32, tm_target=64, tk_target=128))
    assert out_f32.shape == (n2, out_size), out_f32.shape
    assert jnp.allclose(out_f32, ref, atol=1e-4, rtol=1e-4)

    # 2) default bf16 MXU feeds (recommended on all gens), tiled path
    out_bf16 = jax.block_until_ready(
        sage_forward(blocks, x, params, fuse_layers=False))
    assert jnp.allclose(out_bf16, ref, atol=5e-2, rtol=5e-2)

    # 3) fused two-layer kernel (intermediate activation never leaves VMEM)
    out_fused = jax.block_until_ready(
        sage_forward(blocks, x, params, fuse_layers=True))
    assert out_fused.shape == (n2, out_size), out_fused.shape
    assert jnp.allclose(out_fused, ref, atol=5e-2, rtol=5e-2)

    print("KERNEL_OK")
</pallas_src>

<mosaic_0001>
module attributes {stable_mosaic.version = 11 : i64} {
  func.func @_sage_layer_tiled_kernel(%arg0: i32, %arg1: i32, %arg2: memref<64x128xbf16, #tpu.memory_space<vmem>>, %arg3: memref<64x1xf32, #tpu.memory_space<vmem>>, %arg4: memref<128x128xf32, #tpu.memory_space<vmem>>, %arg5: memref<64x128xf32, #tpu.memory_space<vmem>>, %arg6: memref<128x128xf32, #tpu.memory_space<vmem>>, %arg7: memref<128x128xf32, #tpu.memory_space<vmem>>, %arg8: memref<1x128xf32, #tpu.memory_space<vmem>>, %arg9: memref<64x128xf32, #tpu.memory_space<vmem>>, %arg10: memref<64x128xf32, #tpu.memory_space<vmem>>) attributes {dimension_semantics = [#tpu.dimension_semantics<parallel>, #tpu.dimension_semantics<arbitrary>], iteration_bounds = array<i64: 2, 2>, scalar_prefetch = 0 : i64, scratch_operands = 1 : i64, tpu.core_type = #tpu.core_type<tc>, window_params = [{transform_indices = @transform_0, window_bounds = array<i64: 64, 128>}, {transform_indices = @transform_1, window_bounds = array<i64: 64, 1>}, {transform_indices = @transform_2, window_bounds = array<i64: 128, 128>}, {transform_indices = @transform_3, window_bounds = array<i64: 64, 128>}, {pipeline_mode = #tpu.pipeline_mode<synchronous>, transform_indices = @transform_4, window_bounds = array<i64: 128, 128>}, {pipeline_mode = #tpu.pipeline_mode<synchronous>, transform_indices = @transform_5, window_bounds = array<i64: 128, 128>}, {pipeline_mode = #tpu.pipeline_mode<synchronous>, transform_indices = @transform_6, window_bounds = array<i64: 1, 128>}, {transform_indices = @transform_7, window_bounds = array<i64: 64, 128>}]} {
    %c0_i32 = arith.constant 0 : i32
    %0 = arith.cmpi eq, %arg1, %c0_i32 : i32
    %1 = arith.extui %0 : i1 to i32
    %c0_i32_0 = arith.constant 0 : i32
    %2 = arith.cmpi ne, %1, %c0_i32_0 : i32
    scf.if %2 {
      %cst_9 = arith.constant 0.000000e+00 : f32
      %12 = vector.broadcast %cst_9 : f32 to vector<64x128xf32>
      %c0_10 = arith.constant 0 : index
      %c0_11 = arith.constant 0 : index
      %13 = vector.load %arg10[%c0_10, %c0_11] : memref<64x128xf32, #tpu.memory_space<vmem>>, vector<64x128xf32>
      tpu.vector_store %arg10[%c0_10, %c0_11], %12 {strides = array<i32>} : memref<64x128xf32, #tpu.memory_space<vmem>>, vector<64x128xf32>,
    } else {
    }
    %c0 = arith.constant 0 : index
    %c0_1 = arith.constant 0 : index
    %3 = vector.load %arg10[%c0, %c0_1] : memref<64x128xf32, #tpu.memory_space<vmem>>, vector<64x128xf32>
    %c0_2 = arith.constant 0 : index
    %c0_3 = arith.constant 0 : index
    %4 = vector.load %arg2[%c0_2, %c0_3] : memref<64x128xbf16, #tpu.memory_space<vmem>>, vector<64x128xbf16>
    %c0_4 = arith.constant 0 : index
    %c0_5 = arith.constant 0 : index
    %5 = vector.load %arg4[%c0_4, %c0_5] : memref<128x128xf32, #tpu.memory_space<vmem>>, vector<128x128xf32>
    %cst = arith.constant dense<0.000000e+00> : vector<64x128xf32>
    %6 = tpu.matmul %4, %5, %cst {dimension_numbers = #tpu.dot_dimension_numbers<[1], [0], [0], [1], [0, 0, 1, 1], [], []>} : vector<64x128xbf16>, vector<128x128xf32>, vector<64x128xf32> -> vector<64x128xf32>
    %7 = arith.addf %3, %6 : vector<64x128xf32>
    %c0_6 = arith.constant 0 : index
    %c0_7 = arith.constant 0 : index
    %8 = vector.load %arg10[%c0_6, %c0_7] : memref<64x128xf32, #tpu.memory_space<vmem>>, vector<64x128xf32>
    tpu.vector_store %arg10[%c0_6, %c0_7], %7 {strides = array<i32>} : memref<64x128xf32, #tpu.memory_space<vmem>>, vector<64x128xf32>,
    %c1_i32 = arith.constant 1 : i32
    %9 = arith.cmpi eq, %arg1, %c1_i32 : i32
    %10 = arith.extui %9 : i1 to i32
    %c0_i32_8 = arith.constant 0 : i32
    %11 = arith.cmpi ne, %10, %c0_i32_8 : i32
    scf.if %11 {
      %c0_9 = arith.constant 0 : index
      %c0_10 = arith.constant 0 : index
      %12 = vector.load %arg10[%c0_9, %c0_10] : memref<64x128xf32, #tpu.memory_space<vmem>>, vector<64x128xf32>
      %c0_11 = arith.constant 0 : index
      %c0_12 = arith.constant 0 : index
      %13 = vector.load %arg3[%c0_11, %c0_12] : memref<64x1xf32, #tpu.memory_space<vmem>>, vector<64x1xf32>
      %14 = vector.broadcast %13 : vector<64x1xf32> to vector<64x128xf32>
      %15 = arith.mulf %12, %14 : vector<64x128xf32>
      %c0_13 = arith.constant 0 : index
      %c0_14 = arith.constant 0 : index
      %16 = vector.load %arg5[%c0_13, %c0_14] : memref<64x128xf32, #tpu.memory_space<vmem>>, vector<64x128xf32>
      %c0_15 = arith.constant 0 : index
      %c0_16 = arith.constant 0 : index
      %17 = vector.load %arg6[%c0_15, %c0_16] : memref<128x128xf32, #tpu.memory_space<vmem>>, vector<128x128xf32>
      %cst_17 = arith.constant dense<0.000000e+00> : vector<64x128xf32>
      %18 = tpu.matmul %16, %17, %cst_17 {dimension_numbers = #tpu.dot_dimension_numbers<[1], [0], [0], [1], [0, 0, 1, 1], [], []>} : vector<64x128xf32>, vector<128x128xf32>, vector<64x128xf32> -> vector<64x128xf32>
      %c0_18 = arith.constant 0 : index
      %c0_19 = arith.constant 0 : index
      %19 = vector.load %arg7[%c0_18, %c0_19] : memref<128x128xf32, #tpu.memory_space<vmem>>, vector<128x128xf32>
      %cst_20 = arith.constant dense<0.000000e+00> : vector<64x128xf32>
      %20 = tpu.matmul %15, %19, %cst_20 {dimension_numbers = #tpu.dot_dimension_numbers<[1], [0], [0], [1], [0, 0, 1, 1], [], []>} : vector<64x128xf32>, vector<128x128xf32>, vector<64x128xf32> -> vector<64x128xf32>
      %21 = arith.addf %18, %20 : vector<64x128xf32>
      %c0_21 = arith.constant 0 : index
      %c0_22 = arith.constant 0 : index
      %22 = vector.load %arg8[%c0_21, %c0_22] : memref<1x128xf32, #tpu.memory_space<vmem>>, vector<1x128xf32>
      %23 = vector.broadcast %22 : vector<1x128xf32> to vector<64x128xf32>
      %24 = arith.addf %21, %23 : vector<64x128xf32>
      %cst_23 = arith.constant 0.000000e+00 : f32
      %25 = vector.broadcast %cst_23 : f32 to vector<64x128xf32>
      %26 = arith.maximumf %24, %25 : vector<64x128xf32>
      %c0_24 = arith.constant 0 : index
      %c0_25 = arith.constant 0 : index
      %27 = vector.load %arg9[%c0_24, %c0_25] : memref<64x128xf32, #tpu.memory_space<vmem>>, vector<64x128xf32>
      tpu.vector_store %arg9[%c0_24, %c0_25], %26 {strides = array<i32>} : memref<64x128xf32, #tpu.memory_space<vmem>>, vector<64x128xf32>,
    } else {
    }
    return
  }
  func.func @transform_0(%arg0: i32, %arg1: i32) -> (i32, i32) {
    %c0_i32 = arith.constant 0 : i32
    return %arg0, %arg1 : i32, i32
  }
  func.func @transform_1(%arg0: i32, %arg1: i32) -> (i32, i32) {
    %c0_i32 = arith.constant 0 : i32
    %c0_i32_0 = arith.constant 0 : i32
    return %arg0, %c0_i32 : i32, i32
  }
  func.func @transform_2(%arg0: i32, %arg1: i32) -> (i32, i32) {
    %c0_i32 = arith.constant 0 : i32
    %c0_i32_0 = arith.constant 0 : i32
    return %arg1, %c0_i32 : i32, i32
  }
  func.func @transform_3(%arg0: i32, %arg1: i32) -> (i32, i32) {
    %c0_i32 = arith.constant 0 : i32
    %c0_i32_0 = arith.constant 0 : i32
    return %arg0, %c0_i32 : i32, i32
  }
  func.func @transform_4(%arg0: i32, %arg1: i32) -> (i32, i32) {
    %c0_i32 = arith.constant 0 : i32
    %c0_i32_0 = arith.constant 0 : i32
    %c0_i32_1 = arith.constant 0 : i32
    return %c0_i32, %c0_i32_0 : i32, i32
  }
  func.func @transform_5(%arg0: i32, %arg1: i32) -> (i32, i32) {
    %c0_i32 = arith.constant 0 : i32
    %c0_i32_0 = arith.constant 0 : i32
    %c0_i32_1 = arith.constant 0 : i32
    return %c0_i32, %c0_i32_0 : i32, i32
  }
  func.func @transform_6(%arg0: i32, %arg1: i32) -> (i32, i32) {
    %c0_i32 = arith.constant 0 : i32
    %c0_i32_0 = arith.constant 0 : i32
    %c0_i32_1 = arith.constant 0 : i32
    return %c0_i32, %c0_i32_0 : i32, i32
  }
  func.func @transform_7(%arg0: i32, %arg1: i32) -> (i32, i32) {
    %c0_i32 = arith.constant 0 : i32
    %c0_i32_0 = arith.constant 0 : i32
    return %arg0, %c0_i32 : i32, i32
  }
}

</mosaic_0001>

<llo_original>
// kernel: tpu_custom_call.1
$region0: #{tpu_custom_call.1}
  #allocation0 [shape = 'u32[]', space=smem, size = 0x4, offset = 0x4, fixed_abs, tag = 'smem constant byte address 0x4 - core index']
  #allocation1 [shape = 'u32[144,128]{1,0:T(1,128)}', space=vmem, size = 0x12000, scoped, tag = 'internal scratch']
  #allocation2 [shape = 'f32[64,128]{1,0:T(8,128)}', space=vmem, size = 0x8000, scoped, tag = 'scratch operand']
  %s0 = inlined_call_operand.vmem [shape: bf16[128,256], index: 0, kind: input, shape index: {}]
  %s1 = inlined_call_operand.vmem [shape: f32[128,1], index: 1, kind: input, shape index: {}]
  %s2 = inlined_call_operand.hbm [shape: f32[256,128], index: 2, kind: input, shape index: {}]
  %s3 = inlined_call_operand.hbm [shape: f32[256,128], index: 3, kind: input, shape index: {}]
  %s4 = inlined_call_operand.hbm [shape: f32[128,128], index: 4, kind: input, shape index: {}]
  %s5 = inlined_call_operand.hbm [shape: f32[128,128], index: 5, kind: input, shape index: {}]
  %s6 = inlined_call_operand.vmem [shape: f32[1,128], index: 6, kind: input, shape index: {}]
  %s7 = inlined_call_operand.hbm [shape: f32[128,128], index: 7, kind: output, shape index: {}]
  %s8 = sld [smem:[#allocation0]]
  $region126: #{tpu_custom_call.1} parent=0
    _
  %s10 = ssub.s32 1, %s8
  %s11 = scalar_select 0, %s10, %s8
  $region1: #{tpu_custom_call.1} parent=0
    #allocation3 [shape = 'u8[32768]{0}', space=vmem, size = 0x8000, scoped, tag = 'input window, operand 0']
    #allocation4 [shape = 'u8[131072]{0}', space=vmem, size = 0x20000, scoped, tag = 'input window, operand 2']
    #allocation5 [shape = 's32[2]{0}', space=sflag, size = 0x8, scoped, tag = 'scoped memory for tpu_custom_call.1']
    #allocation6 [shape = 's32[2]{0}', space=sflag, size = 0x8, scoped, tag = 'scoped memory for tpu_custom_call.1']
    #allocation7 [shape = 'u8[65536]{0}', space=vmem, size = 0x10000, scoped, tag = 'input window, operand 3']
    #allocation8 [shape = 's32[2]{0}', space=sflag, size = 0x8, scoped, tag = 'scoped memory for tpu_custom_call.1']
    #allocation9 [shape = 'u8[65536]{0}', space=vmem, size = 0x10000, scoped, tag = 'input window, operand 4, single buffered']
    #allocation10 [shape = 'u8[65536]{0}', space=vmem, size = 0x10000, scoped, tag = 'input window, operand 5, single buffered']
    #allocation11 [shape = 's32[1]{0}', space=sflag, size = 0x4, scoped, tag = 'scoped memory for tpu_custom_call.1']
    #allocation12 [shape = 'u8[65536]{0}', space=vmem, size = 0x10000, scoped, tag = 'output window, operand 0']
    %12 = vsyncpa [#allocation5], 0
    %s13 = scalar_lea.sflag [#allocation5], 1
    %14 = vsyncpa %s13, 0
    %15 = vsyncpa [#allocation8], 0
    %s16 = scalar_lea.sflag [#allocation8], 1
    %17 = vsyncpa %s16, 0
    %18 = vsyncpa [#allocation11], 0
    %19 = vsyncpa [#allocation6], 0
    %s20 = scalar_lea.sflag [#allocation6], 1
    %21 = vsyncpa %s20, 0
    loop: start=0, step=1, limit=6
    $region2: #{tpu_custom_call.1} parent=1 // loop_pre_header
      _
    $region3: #{tpu_custom_call.1} parent=1 // loop_header
      %s23 = sphi 0, %s27
      %p24 = scmp.ge.s32.totalorder %s23, 6
      %s30 = sphi 0, %s42
      %s31 = sphi 0, %s38
      %s32 = sphi 0, %s30
      %s33 = sphi 0, %s31
      %s34 = sphi 0, %s32
      %s35 = sphi 0, %s33
      %s47 = sphi 0, %s49
      %s50 = sphi 0, %s47
      %s51 = sphi 0, %s50
      %s67 = sphi 0, %s51
      %s73 = sphi 0, %s75
      %s76 = sphi 0, %s73
      %s77 = sphi 0, %s76
      %s93 = sphi 0, %s77
      %s99 = sphi 0, %s101
      %s102 = sphi 0, %s99
      %s103 = sphi 0, %s102
      %s119 = sphi 0, %s103
      %s125 = sphi 0, %s127
      %s128 = sphi 0, %s125
      %s129 = sphi 0, %s128
      %s145 = sphi 0, %s129
      %s149 = sphi 0, %s149
      %s151 = sphi 0, %s149
      %s152 = sphi 0, %s151
      %s166 = sphi 0, %s152
      %s170 = sphi 0, %s170
      %s172 = sphi 0, %s170
      %s173 = sphi 0, %s172
      %s187 = sphi 0, %s173
      %s191 = sphi 0, %s191
      %s193 = sphi 0, %s191
      %s194 = sphi 0, %s193
      %s208 = sphi 0, %s194
      %s214 = sphi 0, %s216
      %s217 = sphi 0, %s214
      %s218 = sphi 0, %s217
      %s234 = sphi 0, %s218
    $region4: #{tpu_custom_call.1} parent=1 // loop_header_branch
      %26 = sbr.rel (%p24) target = $region8
    $region5: #{tpu_custom_call.1} parent=1 // loop_body
      %s28 = ssub.s32 %s23, 1
      %s29 = ssub.s32 %s23, 2
      %s36 = sadd.s32 1, %s31
      %p37 = scmp.ge.s32.totalorder %s36, 2
      %s38 = scalar_select %p37, 0, %s36
      %s39 = sadd.s32 1, %s30
      %s40 = scalar_select %p37, %s39, %s30
      %p41 = scmp.ge.s32.totalorder %s40, 2
      %s42 = scalar_select %p41, 0, %s40
      %s43 = ssub.s32 %s30, %s42
      %s44 = ssub.s32 %s31, %s38
      %s45 = sor.u32 %s43, %s44
      %p46 = scmp.eq.s32.totalorder %s45, 0
      %s48 = sadd.s32 %s47, 1
      %s49 = scalar_select %p46, %s47, %s48
      %p52 = pneg %p46
      %p53 = scmp.eq.s32.totalorder %s23, 3
      %p54 = por %p52, %p53
      %p55 = scmp.ne.s32.totalorder %s47, %s50
      %p56 = scmp.eq.s32.totalorder %s23, 0
      %p57 = por %p55, %p56
      %p58 = scmp.ne.s32.totalorder %s47, %s50
      %p59 = scmp.eq.s32.totalorder %s28, 3
      %p60 = por %p58, %p59
      %p61 = scmp.ne.s32.totalorder %s50, %s51
      %p62 = scmp.eq.s32.totalorder %s28, 0
      %p63 = por %p61, %p62
      %p64 = scmp.ne.s32.totalorder %s50, %s51
      %p65 = scmp.eq.s32.totalorder %s29, 3
      %p66 = por %p64, %p65
      %p68 = scmp.ne.s32.totalorder %s51, %s67
      %p69 = scmp.eq.s32.totalorder %s29, 0
      %p70 = por %p68, %p69
      %s71 = ssub.s32 %s30, %s42
      %p72 = scmp.eq.s32.totalorder %s71, 0
      %s74 = sadd.s32 %s73, 1
      %s75 = scalar_select %p72, %s73, %s74
      %p78 = pneg %p72
      %p79 = scmp.eq.s32.totalorder %s23, 3
      %p80 = por %p78, %p79
      %p81 = scmp.ne.s32.totalorder %s73, %s76
      %p82 = scmp.eq.s32.totalorder %s23, 0
      %p83 = por %p81, %p82
      %p84 = scmp.ne.s32.totalorder %s73, %s76
      %p85 = scmp.eq.s32.totalorder %s28, 3
      %p86 = por %p84, %p85
      %p87 = scmp.ne.s32.totalorder %s76, %s77
      %p88 = scmp.eq.s32.totalorder %s28, 0
      %p89 = por %p87, %p88
      %p90 = scmp.ne.s32.totalorder %s76, %s77
      %p91 = scmp.eq.s32.totalorder %s29, 3
      %p92 = por %p90, %p91
      %p94 = scmp.ne.s32.totalorder %s77, %s93
      %p95 = scmp.eq.s32.totalorder %s29, 0
      %p96 = por %p94, %p95
      %s97 = ssub.s32 %s31, %s38
      %p98 = scmp.eq.s32.totalorder %s97, 0
      %s100 = sadd.s32 %s99, 1
      %s101 = scalar_select %p98, %s99, %s100
      %p104 = pneg %p98
      %p105 = scmp.eq.s32.totalorder %s23, 3
      %p106 = por %p104, %p105
      %p107 = scmp.ne.s32.totalorder %s99, %s102
      %p108 = scmp.eq.s32.totalorder %s23, 0
      %p109 = por %p107, %p108
      %p110 = scmp.ne.s32.totalorder %s99, %s102
      %p111 = scmp.eq.s32.totalorder %s28, 3
      %p112 = por %p110, %p111
      %p113 = scmp.ne.s32.totalorder %s102, %s103
      %p114 = scmp.eq.s32.totalorder %s28, 0
      %p115 = por %p113, %p114
      %p116 = scmp.ne.s32.totalorder %s102, %s103
      %p117 = scmp.eq.s32.totalorder %s29, 3
      %p118 = por %p116, %p117
      %p120 = scmp.ne.s32.totalorder %s103, %s119
      %p121 = scmp.eq.s32.totalorder %s29, 0
      %p122 = por %p120, %p121
      %s123 = ssub.s32 %s30, %s42
      %p124 = scmp.eq.s32.totalorder %s123, 0
      %s126 = sadd.s32 %s125, 1
      %s127 = scalar_select %p124, %s125, %s126
      %p130 = pneg %p124
      %p131 = scmp.eq.s32.totalorder %s23, 3
      %p132 = por %p130, %p131
      %p133 = scmp.ne.s32.totalorder %s125, %s128
      %p134 = scmp.eq.s32.totalorder %s23, 0
      %p135 = por %p133, %p134
      %p136 = scmp.ne.s32.totalorder %s125, %s128
      %p137 = scmp.eq.s32.totalorder %s28, 3
      %p138 = por %p136, %p137
      %p139 = scmp.ne.s32.totalorder %s128, %s129
      %p140 = scmp.eq.s32.totalorder %s28, 0
      %p141 = por %p139, %p140
      %p142 = scmp.ne.s32.totalorder %s128, %s129
      %p143 = scmp.eq.s32.totalorder %s29, 3
      %p144 = por %p142, %p143
      %p146 = scmp.ne.s32.totalorder %s129, %s145
      %p147 = scmp.eq.s32.totalorder %s29, 0
      %p148 = por %p146, %p147
      %s150 = sadd.s32 %s149, 1
      %p153 = scmp.eq.s32.totalorder %s23, 3
      %p154 = scmp.ne.s32.totalorder %s149, %s151
      %p155 = scmp.eq.s32.totalorder %s23, 0
      %p156 = por %p154, %p155
      %p157 = scmp.ne.s32.totalorder %s149, %s151
      %p158 = scmp.eq.s32.totalorder %s28, 3
      %p159 = por %p157, %p158
      %p160 = scmp.ne.s32.totalorder %s151, %s152
      %p161 = scmp.eq.s32.totalorder %s28, 0
      %p162 = por %p160, %p161
      %p163 = scmp.ne.s32.totalorder %s151, %s152
      %p164 = scmp.eq.s32.totalorder %s29, 3
      %p165 = por %p163, %p164
      %p167 = scmp.ne.s32.totalorder %s152, %s166
      %p168 = scmp.eq.s32.totalorder %s29, 0
      %p169 = por %p167, %p168
      %s171 = sadd.s32 %s170, 1
      %p174 = scmp.eq.s32.totalorder %s23, 3
      %p175 = scmp.ne.s32.totalorder %s170, %s172
      %p176 = scmp.eq.s32.totalorder %s23, 0
      %p177 = por %p175, %p176
      %p178 = scmp.ne.s32.totalorder %s170, %s172
      %p179 = scmp.eq.s32.totalorder %s28, 3
      %p180 = por %p178, %p179
      %p181 = scmp.ne.s32.totalorder %s172, %s173
      %p182 = scmp.eq.s32.totalorder %s28, 0
      %p183 = por %p181, %p182
      %p184 = scmp.ne.s32.totalorder %s172, %s173
      %p185 = scmp.eq.s32.totalorder %s29, 3
      %p186 = por %p184, %p185
      %p188 = scmp.ne.s32.totalorder %s173, %s187
      %p189 = scmp.eq.s32.totalorder %s29, 0
      %p190 = por %p188, %p189
      %s192 = sadd.s32 %s191, 1
      %p195 = scmp.eq.s32.totalorder %s23, 3
      %p196 = scmp.ne.s32.totalorder %s191, %s193
      %p197 = scmp.eq.s32.totalorder %s23, 0
      %p198 = por %p196, %p197
      %p199 = scmp.ne.s32.totalorder %s191, %s193
      %p200 = scmp.eq.s32.totalorder %s28, 3
      %p201 = por %p199, %p200
      %p202 = scmp.ne.s32.totalorder %s193, %s194
      %p203 = scmp.eq.s32.totalorder %s28, 0
      %p204 = por %p202, %p203
      %p205 = scmp.ne.s32.totalorder %s193, %s194
      %p206 = scmp.eq.s32.totalorder %s29, 3
      %p207 = por %p205, %p206
      %p209 = scmp.ne.s32.totalorder %s194, %s208
      %p210 = scmp.eq.s32.totalorder %s29, 0
      %p211 = por %p209, %p210
      %s212 = ssub.s32 %s30, %s42
      %p213 = scmp.eq.s32.totalorder %s212, 0
      %s215 = sadd.s32 %s214, 1
      %s216 = scalar_select %p213, %s214, %s215
      %p219 = pneg %p213
      %p220 = scmp.eq.s32.totalorder %s23, 3
      %p221 = por %p219, %p220
      %p222 = scmp.ne.s32.totalorder %s214, %s217
      %p223 = scmp.eq.s32.totalorder %s23, 0
      %p224 = por %p222, %p223
      %p225 = scmp.ne.s32.totalorder %s214, %s217
      %p226 = scmp.eq.s32.totalorder %s28, 3
      %p227 = por %p225, %p226
      %p228 = scmp.ne.s32.totalorder %s217, %s218
      %p229 = scmp.eq.s32.totalorder %s28, 0
      %p230 = por %p228, %p229
      %p231 = scmp.ne.s32.totalorder %s217, %s218
      %p232 = scmp.eq.s32.totalorder %s29, 3
      %p233 = por %p231, %p232
      %p235 = scmp.ne.s32.totalorder %s218, %s234
      %p236 = scmp.eq.s32.totalorder %s29, 0
      %p237 = por %p235, %p236
      %p238 = scmp.le.s32.totalorder 1, %s23
      %p239 = scmp.lt.s32.totalorder %s23, 5
      %p240 = pnand %p238, %p239
      %p241 = pneg %p240
      // Predicated region
      $region9: #{tpu_custom_call.1} parent=5 // pred_check
        _
      $region10: #{tpu_custom_call.1} parent=5 // pred_check_branch
        %243 = sbr.rel (%p240) target = $region12
      $region11: #{tpu_custom_call.1} parent=5 // pred_region
        %s244 = ssub.s32 %s23, 1
        // Predicated region
        $region13: #{tpu_custom_call.1} parent=11 // pred_check
          %p245 = pneg %p162
        $region14: #{tpu_custom_call.1} parent=11 // pred_check_branch
          %247 = sbr.rel (%p245) target = $region16
        $region15: #{tpu_custom_call.1} parent=11 // pred_region
          %s249 = ssub.s32 2048, 2048
          %250 = vsyncadd [#allocation8], %s249
          %s251 = sshll.u32 [#allocation9], 4
          %s252 = int_to_ptr.vmem [resolvable:$true] %s251
          %257 = dma.hbm_to_vmem [thread:$0]  %s4, 2048, %s252, [#allocation8], 128, 128, 8
        $region16: #{tpu_custom_call.1} parent=11 // pred_fallthru
          _
        // Predicated region
        $region17: #{tpu_custom_call.1} parent=11 // pred_check
          %p258 = pneg %p183
        $region18: #{tpu_custom_call.1} parent=11 // pred_check_branch
          %260 = sbr.rel (%p258) target = $region20
        $region19: #{tpu_custom_call.1} parent=11 // pred_region
          %s262 = ssub.s32 2048, 2048
          %263 = vsyncadd [#allocation11], %s262
          %s264 = sshll.u32 [#allocation10], 4
          %s265 = int_to_ptr.vmem [resolvable:$true] %s264
          %270 = dma.hbm_to_vmem [thread:$0]  %s5, 2048, %s265, [#allocation11], 128, 128, 8
        $region20: #{tpu_custom_call.1} parent=11 // pred_fallthru
          _
        // Predicated region
        $region21: #{tpu_custom_call.1} parent=11 // pred_check
          %p271 = pneg %p204
        $region22: #{tpu_custom_call.1} parent=11 // pred_check_branch
          %273 = sbr.rel (%p271) target = $region24
        $region23: #{tpu_custom_call.1} parent=11 // pred_region
          _
        $region24: #{tpu_custom_call.1} parent=11 // pred_fallthru
          _
      $region12: #{tpu_custom_call.1} parent=5 // pred_fallthru
        _
      %p274 = scmp.lt.s32.totalorder %s23, 4
      // Predicated region
      $region25: #{tpu_custom_call.1} parent=5 // pred_check
        %p275 = pneg %p274
      $region26: #{tpu_custom_call.1} parent=5 // pred_check_branch
        %277 = sbr.rel (%p275) target = $region28
      $region27: #{tpu_custom_call.1} parent=5 // pred_region
        // Predicated region
        $region29: #{tpu_custom_call.1} parent=27 // pred_check
          %p278 = pneg %p57
        $region30: #{tpu_custom_call.1} parent=27 // pred_check_branch
          %280 = sbr.rel (%p278) target = $region32
        $region31: #{tpu_custom_call.1} parent=27 // pred_region
          %s281 = sand.u32 %s47, 1
          %s282 = sand.u32 %s47, 1
          %s283 = smul.addr %s282, 32
          %s284 = scalar_lea.vmem [#allocation3], %s283
          %s285 = smul.u32 8, %s30
          %s286 = smul.addr %s285, 2
          %s287 = sadd.s32 %s31, %s286
          %s288 = smul.addr %s287, 4
          %s289 = scalar_lea.vmem %s0, %s288
          // Predicated region
          $region33: #{tpu_custom_call.1} parent=31 // pred_check
            _
          $region34: #{tpu_custom_call.1} parent=31 // pred_check_branch
            %291 = sbr.rel (0) target = $region36
          $region35: #{tpu_custom_call.1} parent=31 // pred_region
            // Predicated region
            $region37: #{tpu_custom_call.1} parent=35 // pred_check
              _
            $region38: #{tpu_custom_call.1} parent=35 // pred_check_branch
              %293 = sbr.rel target = $region40
            $region39: #{tpu_custom_call.1} parent=35 // pred_region
              // Predicated region
              $region52: #{tpu_custom_call.1} parent=39 // pred_check
                _
              $region53: #{tpu_custom_call.1} parent=39 // pred_check_branch
                %322 = sbr.rel (0) target = $region55
              $region54: #{tpu_custom_call.1} parent=39 // pred_region
                loop: start=0, step=1, limit=1
                $region56: #{tpu_custom_call.1} parent=54 // loop_pre_header
                  _
                $region57: #{tpu_custom_call.1} parent=54 // loop_header
                  %s324 = sphi 0, %s328
                  %p325 = scmp.ge.s32.totalorder %s324, 1
                  %s329 = sphi %s289, %s289
                  %s330 = sphi %s284, %s284
                $region58: #{tpu_custom_call.1} parent=54 // loop_header_branch
                  %327 = sbr.rel (%p325) target = $region62
                $region59: #{tpu_custom_call.1} parent=54 // loop_body
                  _
                $region60: #{tpu_custom_call.1} parent=54 // loop_footer
                  %s328 = sadd.s32 1, %s324
                $region61: #{tpu_custom_call.1} parent=54 // loop_footer_branch
                  %323 = sbr.rel target = $region57
                $region62: #{tpu_custom_call.1} parent=54 // loop_exit
                  _
                loop: start=0, step=1, limit=1
                $region63: #{tpu_custom_call.1} parent=54 // loop_pre_header
                  _
                $region64: #{tpu_custom_call.1} parent=54 // loop_header
                  %s333 = sphi 0, %s337
                  %p334 = scmp.ge.s32.totalorder %s333, 1
                  %s338 = sphi %s289, %s289
                  %s339 = sphi %s284, %s284
                $region65: #{tpu_custom_call.1} parent=54 // loop_header_branch
                  %336 = sbr.rel (%p334) target = $region69
                $region66: #{tpu_custom_call.1} parent=54 // loop_body
                  %v340 = vld [vmem:[%s338] sm:$0xf]
                  %341 = vst [vmem:[%s339] sm:$0xf] %v340
                  %v342 = vld [vmem:[%s338 + $0x8] sm:$0xf]
                  %343 = vst [vmem:[%s339 + $0x4] sm:$0xf] %v342
                  %v344 = vld [vmem:[%s338 + $0x10] sm:$0xf]
                  %345 = vst [vmem:[%s339 + $0x8] sm:$0xf] %v344
                  %v346 = vld [vmem:[%s338 + $0x18] sm:$0xf]
                  %347 = vst [vmem:[%s339 + $0xc] sm:$0xf] %v346
                  %v348 = vld [vmem:[%s338 + $0x20] sm:$0xf]
                  %349 = vst [vmem:[%s339 + $0x10] sm:$0xf] %v348
                  %v350 = vld [vmem:[%s338 + $0x28] sm:$0xf]
                  %351 = vst [vmem:[%s339 + $0x14] sm:$0xf] %v350
                  %v352 = vld [vmem:[%s338 + $0x30] sm:$0xf]
                  %353 = vst [vmem:[%s339 + $0x18] sm:$0xf] %v352
                  %v354 = vld [vmem:[%s338 + $0x38] sm:$0xf]
                  %355 = vst [vmem:[%s339 + $0x1c] sm:$0xf] %v354
                $region67: #{tpu_custom_call.1} parent=54 // loop_footer
                  %s337 = sadd.s32 1, %s333
                $region68: #{tpu_custom_call.1} parent=54 // loop_footer_branch
                  %332 = sbr.rel target = $region64
                $region69: #{tpu_custom_call.1} parent=54 // loop_exit
                  _
              $region55: #{tpu_custom_call.1} parent=39 // pred_fallthru
                _
            $region40: #{tpu_custom_call.1} parent=35 // pred_fallthru
              _
            // Predicated region
            $region41: #{tpu_custom_call.1} parent=35 // pred_check
              _
            $region42: #{tpu_custom_call.1} parent=35 // pred_check_branch
              %295 = sbr.rel (0) target = $region44
            $region43: #{tpu_custom_call.1} parent=35 // pred_region
              loop: start=0, step=1, limit=1
              $region45: #{tpu_custom_call.1} parent=43 // loop_pre_header
                _
              $region46: #{tpu_custom_call.1} parent=43 // loop_header
                %s298 = sphi 0, %s302
                %p299 = scmp.ge.s32.totalorder %s298, 1
                %s303 = sphi %s289, %s289
                %s304 = sphi %s284, %s284
              $region47: #{tpu_custom_call.1} parent=43 // loop_header_branch
                %301 = sbr.rel (%p299) target = $region51
              $region48: #{tpu_custom_call.1} parent=43 // loop_body
                %v305 = vld [vmem:[%s303] sm:$0xf]
                %306 = vst [vmem:[%s304] sm:$0xf] %v305
                %v307 = vld [vmem:[%s303 + $0x8] sm:$0xf]
                %308 = vst [vmem:[%s304 + $0x4] sm:$0xf] %v307
                %v309 = vld [vmem:[%s303 + $0x10] sm:$0xf]
                %310 = vst [vmem:[%s304 + $0x8] sm:$0xf] %v309
                %v311 = vld [vmem:[%s303 + $0x18] sm:$0xf]
                %312 = vst [vmem:[%s304 + $0xc] sm:$0xf] %v311
                %v313 = vld [vmem:[%s303 + $0x20] sm:$0xf]
                %314 = vst [vmem:[%s304 + $0x10] sm:$0xf] %v313
                %v315 = vld [vmem:[%s303 + $0x28] sm:$0xf]
                %316 = vst [vmem:[%s304 + $0x14] sm:$0xf] %v315
                %v317 = vld [vmem:[%s303 + $0x30] sm:$0xf]
                %318 = vst [vmem:[%s304 + $0x18] sm:$0xf] %v317
                %v319 = vld [vmem:[%s303 + $0x38] sm:$0xf]
                %320 = vst [vmem:[%s304 + $0x1c] sm:$0xf] %v319
              $region49: #{tpu_custom_call.1} parent=43 // loop_footer
                %s302 = sadd.s32 1, %s298
              $region50: #{tpu_custom_call.1} parent=43 // loop_footer_branch
                %297 = sbr.rel target = $region46
              $region51: #{tpu_custom_call.1} parent=43 // loop_exit
                _
            $region44: #{tpu_custom_call.1} parent=35 // pred_fallthru
              _
          $region36: #{tpu_custom_call.1} parent=31 // pred_fallthru
            _
          %356 = vnop
        $region32: #{tpu_custom_call.1} parent=27 // pred_fallthru
          _
        // Predicated region
        $region70: #{tpu_custom_call.1} parent=27 // pred_check
          %p357 = pneg %p83
        $region71: #{tpu_custom_call.1} parent=27 // pred_check_branch
          %359 = sbr.rel (%p357) target = $region73
        $region72: #{tpu_custom_call.1} parent=27 // pred_region
          %s360 = smul.u32 8, %s30
          %p361 = scmp.lt.s32.totalorder %s360, 15
          %s362 = scalar_select %p361, %s360, 15
          %s363 = smul.addr %s362, 8
          %s364 = scalar_lea.vmem %s1, %s363
          %s365 = smul.u32 8, %s30
        $region73: #{tpu_custom_call.1} parent=27 // pred_fallthru
          _
        // Predicated region
        $region74: #{tpu_custom_call.1} parent=27 // pred_check
          %p366 = pneg %p109
        $region75: #{tpu_custom_call.1} parent=27 // pred_check_branch
          %368 = sbr.rel (%p366) target = $region77
        $region76: #{tpu_custom_call.1} parent=27 // pred_region
          %s369 = sand.u32 %s99, 1
          %s370 = scalar_lea.sflag [#allocation5], %s369
          %s371 = sand.u32 %s99, 1
          %s372 = smul.addr %s371, 128
          %s373 = scalar_lea.vmem [#allocation4], %s372
          %s374 = smul.u32 16, %s31
          %s376 = ssub.s32 2048, 2048
          %377 = vsyncadd %s370, %s376
          %s378 = smul.addr %s374, 128
          %s379 = scalar_lea.hbm %s2, %s378
          %s380 = sshll.u32 %s373, 4
          %s381 = int_to_ptr.vmem [resolvable:$true] %s380
          %386 = dma.hbm_to_vmem [thread:$0]  %s379, 2048, %s381, %s370, 128, 128, 8
        $region77: #{tpu_custom_call.1} parent=27 // pred_fallthru
          _
        // Predicated region
        $region78: #{tpu_custom_call.1} parent=27 // pred_check
          %p387 = pneg %p135
        $region79: #{tpu_custom_call.1} parent=27 // pred_check_branch
          %389 = sbr.rel (%p387) target = $region81
        $region80: #{tpu_custom_call.1} parent=27 // pred_region
          %s390 = sand.u32 %s23, 1
          %s391 = scalar_lea.sflag [#allocation8], %s390
          %s392 = sand.u32 %s125, 1
          %s393 = smul.addr %s392, 64
          %s394 = scalar_lea.vmem [#allocation7], %s393
          %s395 = smul.u32 8, %s30
          %s397 = ssub.s32 1024, 1024
          %398 = vsyncadd %s391, %s397
          %s399 = smul.addr %s395, 128
          %s400 = scalar_lea.hbm %s3, %s399
          %s401 = sshll.u32 %s394, 4
          %s402 = int_to_ptr.vmem [resolvable:$true] %s401
          %407 = dma.hbm_to_vmem [thread:$0]  %s400, 1024, %s402, %s391, 128, 128, 8
        $region81: #{tpu_custom_call.1} parent=27 // pred_fallthru
          _
      $region28: #{tpu_custom_call.1} parent=5 // pred_fallthru
        _
      %p408 = scmp.le.s32.totalorder 1, %s23
      %p409 = scmp.lt.s32.totalorder %s23, 5
      %p410 = pnand %p408, %p409
      %p411 = pneg %p410
      // Predicated region
      $region82: #{tpu_custom_call.1} parent=5 // pred_check
        _
      $region83: #{tpu_custom_call.1} parent=5 // pred_check_branch
        %413 = sbr.rel (%p410) target = $region85
      $region84: #{tpu_custom_call.1} parent=5 // pred_region
        %s414 = ssub.s32 %s23, 1
        %s415 = sand.u32 %s50, 1
        %s416 = sand.u32 %s50, 1
        %s417 = smul.addr %s416, 32
        %s418 = scalar_lea.vmem [#allocation3], %s417
        // Predicated region
        $region86: #{tpu_custom_call.1} parent=84 // pred_check
          %p419 = pneg %p63
        $region87: #{tpu_custom_call.1} parent=84 // pred_check_branch
          %421 = sbr.rel (%p419) target = $region89
        $region88: #{tpu_custom_call.1} parent=84 // pred_region
          _
        $region89: #{tpu_custom_call.1} parent=84 // pred_fallthru
          _
        %s422 = sand.u32 %s102, 1
        %s423 = scalar_lea.sflag [#allocation5], %s422
        %s424 = sand.u32 %s102, 1
        %s425 = smul.addr %s424, 128
        %s426 = scalar_lea.vmem [#allocation4], %s425
        // Predicated region
        $region90: #{tpu_custom_call.1} parent=84 // pred_check
          %p427 = pneg %p115
        $region91: #{tpu_custom_call.1} parent=84 // pred_check_branch
          %429 = sbr.rel (%p427) target = $region93
        $region92: #{tpu_custom_call.1} parent=84 // pred_region
          %430 = dma.done %s423, 2048
        $region93: #{tpu_custom_call.1} parent=84 // pred_fallthru
          _
        %s431 = sand.u32 %s28, 1
        %s432 = scalar_lea.sflag [#allocation8], %s431
        %s433 = sand.u32 %s128, 1
        %s434 = smul.addr %s433, 64
        %s435 = scalar_lea.vmem [#allocation7], %s434
        // Predicated region
        $region94: #{tpu_custom_call.1} parent=84 // pred_check
          %p436 = pneg %p141
        $region95: #{tpu_custom_call.1} parent=84 // pred_check_branch
          %438 = sbr.rel (%p436) target = $region97
        $region96: #{tpu_custom_call.1} parent=84 // pred_region
          %439 = dma.done %s432, 1024
        $region97: #{tpu_custom_call.1} parent=84 // pred_fallthru
          _
        // Predicated region
        $region98: #{tpu_custom_call.1} parent=84 // pred_check
          %p440 = pneg %p162
        $region99: #{tpu_custom_call.1} parent=84 // pred_check_branch
          %442 = sbr.rel (%p440) target = $region101
        $region100: #{tpu_custom_call.1} parent=84 // pred_region
          %443 = dma.done [#allocation8], 2048
        $region101: #{tpu_custom_call.1} parent=84 // pred_fallthru
          _
        // Predicated region
        $region102: #{tpu_custom_call.1} parent=84 // pred_check
          %p444 = pneg %p183
        $region103: #{tpu_custom_call.1} parent=84 // pred_check_branch
          %446 = sbr.rel (%p444) target = $region105
        $region104: #{tpu_custom_call.1} parent=84 // pred_region
          %447 = dma.done [#allocation11], 2048
        $region105: #{tpu_custom_call.1} parent=84 // pred_fallthru
          _
        %s448 = sand.u32 %s50, 1
        %s449 = sand.u32 %s50, 1
        %s450 = smul.addr %s449, 32
        %s451 = scalar_lea.vmem [#allocation3], %s450
        %p452 = pneg %p63
        %p453 = pneg %p60
        %s454 = smul.u32 8, %s32
        %p455 = scmp.lt.s32.totalorder %s454, 15
        %s456 = scalar_select %p455, %s454, 15
        %s457 = smul.addr %s456, 8
        %s458 = scalar_lea.vmem %s1, %s457
        %p459 = pneg %p89
        %p460 = pneg %p86
        %s461 = sand.u32 %s102, 1
        %s462 = scalar_lea.sflag [#allocation5], %s461
        %s463 = sand.u32 %s102, 1
        %s464 = smul.addr %s463, 128
        %s465 = scalar_lea.vmem [#allocation4], %s464
        %p466 = pneg %p115
        %p467 = pneg %p112
        %s468 = sand.u32 %s28, 1
        %s469 = scalar_lea.sflag [#allocation8], %s468
        %s470 = sand.u32 %s128, 1
        %s471 = smul.addr %s470, 64
        %s472 = scalar_lea.vmem [#allocation7], %s471
        %p473 = pneg %p141
        %p474 = pneg %p138
        %p475 = pneg %p162
        %p476 = pneg %p159
        %p477 = pneg %p183
        %p478 = pneg %p180
        %p479 = pneg %p204
        %p480 = pneg %p201
        %p481 = pneg %p230
        %p482 = pneg %p227
        %s483 = sand.u32 %s217, 1
        %s484 = scalar_lea.sflag [#allocation6], %s483
        %s485 = sand.u32 %s217, 1
        %s486 = smul.addr %s485, 64
        %s487 = scalar_lea.vmem [#allocation12], %s486
        %s488 = smul.u32 8, %s32
        %s489 = smul.u32 8, %s32
        %p490 = scmp.lt.s32.totalorder %s489, 15
        %s491 = scalar_select %p490, %s489, 15
        %s492 = smul.addr %s491, 8
        %s493 = scalar_lea.vmem %s1, %s492
        %s494 = smul.u32 8, %s32
        %s495 = smul.u32 16, %s33
        %s496 = smul.u32 8, %s32
        %s497 = smul.u32 8, %s32
        %p499 = scmp.eq.s32.totalorder %s33, 0
        // Predicated region
        $region106: #{tpu_custom_call.1} parent=84 // pred_check
          %p500 = pneg %p499
        $region107: #{tpu_custom_call.1} parent=84 // pred_check_branch
          %502 = sbr.rel (%p500) target = $region109
        $region108: #{tpu_custom_call.1} parent=84 // pred_region
          %503 = vst [vmem:[#allocation2] sm:$0xff] 0.0
          %504 = vst [vmem:[#allocation2 + $0x8] sm:$0xff] 0.0
          %505 = vst [vmem:[#allocation2 + $0x10] sm:$0xff] 0.0
          %506 = vst [vmem:[#allocation2 + $0x18] sm:$0xff] 0.0
          %507 = vst [vmem:[#allocation2 + $0x20] sm:$0xff] 0.0
          %508 = vst [vmem:[#allocation2 + $0x28] sm:$0xff] 0.0
          %509 = vst [vmem:[#allocation2 + $0x30] sm:$0xff] 0.0
          %510 = vst [vmem:[#allocation2 + $0x38] sm:$0xff] 0.0
        $region109: #{tpu_custom_call.1} parent=84 // pred_fallthru
          _
        %v511 = vld [vmem:[#allocation2] sm:$0xff]
        %v512 = vld [vmem:[#allocation2 + $0x8] sm:$0xff]
        %v513 = vld [vmem:[#allocation2 + $0x10] sm:$0xff]
        %v514 = vld [vmem:[#allocation2 + $0x18] sm:$0xff]
        %v515 = vld [vmem:[#allocation2 + $0x20] sm:$0xff]
        %v516 = vld [vmem:[#allocation2 + $0x28] sm:$0xff]
        %v517 = vld [vmem:[#allocation2 + $0x30] sm:$0xff]
        %v518 = vld [vmem:[#allocation2 + $0x38] sm:$0xff]
        %v519 = vld [vmem:[%s418] sm:$0xf]
        %v520 = vld [vmem:[%s418 + $0x4] sm:$0xf]
        %v521 = vld [vmem:[%s418 + $0x8] sm:$0xf]
        %v522 = vld [vmem:[%s418 + $0xc] sm:$0xf]
        %v523 = vld [vmem:[%s418 + $0x10] sm:$0xf]
        %v524 = vld [vmem:[%s418 + $0x14] sm:$0xf]
        %v525 = vld [vmem:[%s418 + $0x18] sm:$0xf]
        %v526 = vld [vmem:[%s418 + $0x1c] sm:$0xf]
        %v527 = vld [vmem:[%s426] sm:$0xff]
        %v528 = vld [vmem:[%s426 + $0x8] sm:$0xff]
        %v529 = vld [vmem:[%s426 + $0x10] sm:$0xff]
        %v530 = vld [vmem:[%s426 + $0x18] sm:$0xff]
        %v531 = vld [vmem:[%s426 + $0x20] sm:$0xff]
        %v532 = vld [vmem:[%s426 + $0x28] sm:$0xff]
        %v533 = vld [vmem:[%s426 + $0x30] sm:$0xff]
        %v534 = vld [vmem:[%s426 + $0x38] sm:$0xff]
        %v535 = vld [vmem:[%s426 + $0x40] sm:$0xff]
        %v536 = vld [vmem:[%s426 + $0x48] sm:$0xff]
        %v537 = vld [vmem:[%s426 + $0x50] sm:$0xff]
        %v538 = vld [vmem:[%s426 + $0x58] sm:$0xff]
        %v539 = vld [vmem:[%s426 + $0x60] sm:$0xff]
        %v540 = vld [vmem:[%s426 + $0x68] sm:$0xff]
        %v541 = vld [vmem:[%s426 + $0x70] sm:$0xff]
        %v542 = vld [vmem:[%s426 + $0x78] sm:$0xff]
        %v551 = vunpack.c.l.b16 %v519
        %v552 = vunpack.c.l.b16 %v520
        %v553 = vunpack.c.l.b16 %v521
        %v554 = vunpack.c.l.b16 %v522
        %v555 = vunpack.c.l.b16 %v523
        %v556 = vunpack.c.l.b16 %v524
        %v557 = vunpack.c.l.b16 %v525
        %v558 = vunpack.c.l.b16 %v526
        %v559 = vpack.c.b16 %v552, %v551
        %v560 = vpack.c.b16 %v554, %v553
        %v561 = vpack.c.b16 %v556, %v555
        %v562 = vpack.c.b16 %v558, %v557
        %567 = vmatprep.subr.mxu0 0.0
        %568 = vmatpush1.msra.mxu0 %v527
        %569 = vmatprep.subr.mxu0 0.0
        %570 = vmatpush1.msra.mxu0 %v528
        %571 = vmatprep.subr.mxu0 0.0
        %572 = vmatpush1.msra.mxu0 %v529
        %573 = vmatprep.subr.mxu0 0.0
        %574 = vmatpush1.msra.mxu0 %v530
        %575 = vmatprep.subr.mxu0 0.0
        %576 = vmatpush1.msra.mxu0 %v531
        %577 = vmatprep.subr.mxu0 0.0
        %578 = vmatpush1.msra.mxu0 %v532
        %579 = vmatprep.subr.mxu0 0.0
        %580 = vmatpush1.msra.mxu0 %v533
        %581 = vmatprep.subr.mxu0 0.0
        %582 = vmatpush1.msra.mxu0 %v534
        %583 = vmatprep.subr.mxu0 0.0
        %584 = vmatpush1.msra.mxu0 %v535
        %585 = vmatprep.subr.mxu0 0.0
        %586 = vmatpush1.msra.mxu0 %v536
        %587 = vmatprep.subr.mxu0 0.0
        %588 = vmatpush1.msra.mxu0 %v537
        %589 = vmatprep.subr.mxu0 0.0
        %590 = vmatpush1.msra.mxu0 %v538
        %591 = vmatprep.subr.mxu0 0.0
        %592 = vmatpush1.msra.mxu0 %v539
        %593 = vmatprep.subr.mxu0 0.0
        %594 = vmatpush1.msra.mxu0 %v540
        %595 = vmatprep.subr.mxu0 0.0
        %596 = vmatpush1.msra.mxu0 %v541
        %597 = vmatprep.subr.mxu0 0.0
        %598 = vmatpush1.msra.mxu0 %v542
        %599 = vmatprep.subr.mxu0 0.0
        %600 = vmatpush1.msra.mxu0 0.0
        %601 = vmatprep.subr.mxu0 0.0
        %602 = vmatpush1.msra.mxu0 0.0
        %603 = vmatprep.subr.mxu0 0.0
        %604 = vmatpush1.msra.mxu0 0.0
        %605 = vmatprep.subr.mxu0 0.0
        %606 = vmatpush1.msra.mxu0 0.0
        %607 = vmatprep.subr.mxu0 0.0
        %608 = vmatpush1.msra.mxu0 0.0
        %609 = vmatprep.subr.mxu0 0.0
        %610 = vmatpush1.msra.mxu0 0.0
        %611 = vmatprep.subr.mxu0 0.0
        %612 = vmatpush1.msra.mxu0 0.0
        %613 = vmatprep.subr.mxu0 0.0
        %614 = vmatpush1.msra.mxu0 0.0
        %615 = vmatprep.subr.mxu0 0.0
        %616 = vmatpush1.msra.mxu0 0.0
        %617 = vmatprep.subr.mxu0 0.0
        %618 = vmatpush1.msra.mxu0 0.0
        %619 = vmatprep.subr.mxu0 0.0
        %620 = vmatpush1.msra.mxu0 0.0
        %621 = vmatprep.subr.mxu0 0.0
        %622 = vmatpush1.msra.mxu0 0.0
        %623 = vmatprep.subr.mxu0 0.0
        %624 = vmatpush1.msra.mxu0 0.0
        %625 = vmatprep.subr.mxu0 0.0
        %626 = vmatpush1.msra.mxu0 0.0
        %627 = vmatprep.subr.mxu0 0.0
        %628 = vmatpush1.msra.mxu0 0.0
        %629 = vmatprep.subr.mxu0 0.0
        %630 = vmatpush1.msra.mxu0 0.0
        %631 = vmatprep.mubr.bf16.mxu0 0
        %632 = vmatmul.mubr.bf16.gmra.mrb[0].mxu0 %v559
        %v633 = vpop.f32.mrb[0].mxu0
        %v634 = vadd.f32 0.0, %v633
        %v635 = vpop.f32.mrb[0].mxu0
        %v636 = vpop.f32.mrb[0].mxu0
        %v637 = vadd.f32 0.0, %v636
        %v638 = vpop.f32.mrb[0].mxu0
        %639 = vmatprep.mubr.bf16.mxu0 0
        %640 = vmatmul.mubr.bf16.gmra.mrb[0].mxu0 %v560
        %v641 = vpop.f32.mrb[0].mxu0
        %v642 = vadd.f32 0.0, %v641
        %v643 = vpop.f32.mrb[0].mxu0
        %v644 = vpop.f32.mrb[0].mxu0
        %v645 = vadd.f32 0.0, %v644
        %v646 = vpop.f32.mrb[0].mxu0
        %647 = vmatprep.mubr.bf16.mxu0 0
        %648 = vmatmul.mubr.bf16.gmra.mrb[0].mxu0 %v561
        %v649 = vpop.f32.mrb[0].mxu0
        %v650 = vadd.f32 0.0, %v649
        %v651 = vpop.f32.mrb[0].mxu0
        %v652 = vpop.f32.mrb[0].mxu0
        %v653 = vadd.f32 0.0, %v652
        %v654 = vpop.f32.mrb[0].mxu0
        %655 = vmatprep.mubr.bf16.mxu0 0
        %656 = vmatmul.mubr.bf16.gmra.mrb[0].mxu0 %v562
        %v657 = vpop.f32.mrb[0].mxu0
        %v658 = vadd.f32 0.0, %v657
        %v659 = vpop.f32.mrb[0].mxu0
        %v660 = vpop.f32.mrb[0].mxu0
        %v661 = vadd.f32 0.0, %v660
        %v662 = vpop.f32.mrb[0].mxu0
        %663 = vdwg.mxu0
        %v664 = vadd.f32 %v511, %v634
        %v665 = vadd.f32 %v512, %v637
        %v666 = vadd.f32 %v513, %v642
        %v667 = vadd.f32 %v514, %v645
        %v668 = vadd.f32 %v515, %v650
        %v669 = vadd.f32 %v516, %v653
        %v670 = vadd.f32 %v517, %v658
        %v671 = vadd.f32 %v518, %v661
        %672 = vst [vmem:[#allocation2] sm:$0xff] %v664
        %673 = vst [vmem:[#allocation2 + $0x8] sm:$0xff] %v665
        %674 = vst [vmem:[#allocation2 + $0x10] sm:$0xff] %v666
        %675 = vst [vmem:[#allocation2 + $0x18] sm:$0xff] %v667
        %676 = vst [vmem:[#allocation2 + $0x20] sm:$0xff] %v668
        %677 = vst [vmem:[#allocation2 + $0x28] sm:$0xff] %v669
        %678 = vst [vmem:[#allocation2 + $0x30] sm:$0xff] %v670
        %679 = vst [vmem:[#allocation2 + $0x38] sm:$0xff] %v671
        %p680 = scmp.eq.s32.totalorder %s33, 1
        // Predicated region
        $region110: #{tpu_custom_call.1} parent=84 // pred_check
          %p681 = pneg %p680
        $region111: #{tpu_custom_call.1} parent=84 // pred_check_branch
          %683 = sbr.rel (%p681) target = $region113
        $region112: #{tpu_custom_call.1} parent=84 // pred_region
          %v684 = vld [vmem:[#allocation2] sm:$0xff]
          %v685 = vld [vmem:[#allocation2 + $0x8] sm:$0xff]
          %v686 = vld [vmem:[#allocation2 + $0x10] sm:$0xff]
          %v687 = vld [vmem:[#allocation2 + $0x18] sm:$0xff]
          %v688 = vld [vmem:[#allocation2 + $0x20] sm:$0xff]
          %v689 = vld [vmem:[#allocation2 + $0x28] sm:$0xff]
          %v690 = vld [vmem:[#allocation2 + $0x30] sm:$0xff]
          %v691 = vld [vmem:[#allocation2 + $0x38] sm:$0xff]
          %v692 = vld [vmem:[%s493] sm:$0xff]
          %v693 = vld [vmem:[%s493 + $0x8] sm:$0xff]
          %v694 = vld [vmem:[%s493 + $0x10] sm:$0xff]
          %v695 = vld [vmem:[%s493 + $0x18] sm:$0xff]
          %v696 = vld [vmem:[%s493 + $0x20] sm:$0xff]
          %v697 = vld [vmem:[%s493 + $0x28] sm:$0xff]
          %v698 = vld [vmem:[%s493 + $0x30] sm:$0xff]
          %v699 = vld [vmem:[%s493 + $0x38] sm:$0xff]
          %701 = vset.pattern.permute.xlu0 0
          %702 = vperm.xlu0 %701, %v692
          %v703 = vpop.permute.xlu0 %702
          %706 = vset.pattern.permute.xlu0 0
          %707 = vperm.xlu0 %706, %v693
          %v708 = vpop.permute.xlu0 %707
          %711 = vset.pattern.permute.xlu0 0
          %712 = vperm.xlu0 %711, %v694
          %v713 = vpop.permute.xlu0 %712
          %716 = vset.pattern.permute.xlu0 0
          %717 = vperm.xlu0 %716, %v695
          %v718 = vpop.permute.xlu0 %717
          %721 = vset.pattern.permute.xlu0 0
          %722 = vperm.xlu0 %721, %v696
          %v723 = vpop.permute.xlu0 %722
          %726 = vset.pattern.permute.xlu0 0
          %727 = vperm.xlu0 %726, %v697
          %v728 = vpop.permute.xlu0 %727
          %731 = vset.pattern.permute.xlu0 0
          %732 = vperm.xlu0 %731, %v698
          %v733 = vpop.permute.xlu0 %732
          %736 = vset.pattern.permute.xlu0 0
          %737 = vperm.xlu0 %736, %v699
          %v738 = vpop.permute.xlu0 %737
          %v740 = vmul.f32 %v684, %v703
          %v741 = vmul.f32 %v685, %v708
          %v742 = vmul.f32 %v686, %v713
          %v743 = vmul.f32 %v687, %v718
          %v744 = vmul.f32 %v688, %v723
          %v745 = vmul.f32 %v689, %v728
          %v746 = vmul.f32 %v690, %v733
          %v747 = vmul.f32 %v691, %v738
          %v748 = vld [vmem:[%s435] sm:$0xff]
          %v749 = vld [vmem:[%s435 + $0x8] sm:$0xff]
          %v750 = vld [vmem:[%s435 + $0x10] sm:$0xff]
          %v751 = vld [vmem:[%s435 + $0x18] sm:$0xff]
          %v752 = vld [vmem:[%s435 + $0x20] sm:$0xff]
          %v753 = vld [vmem:[%s435 + $0x28] sm:$0xff]
          %v754 = vld [vmem:[%s435 + $0x30] sm:$0xff]
          %v755 = vld [vmem:[%s435 + $0x38] sm:$0xff]
          %v756 = vld [vmem:[#allocation9] sm:$0xff]
          %v757 = vld [vmem:[#allocation9 + $0x8] sm:$0xff]
          %v758 = vld [vmem:[#allocation9 + $0x10] sm:$0xff]
          %v759 = vld [vmem:[#allocation9 + $0x18] sm:$0xff]
          %v760 = vld [vmem:[#allocation9 + $0x20] sm:$0xff]
          %v761 = vld [vmem:[#allocation9 + $0x28] sm:$0xff]
          %v762 = vld [vmem:[#allocation9 + $0x30] sm:$0xff]
          %v763 = vld [vmem:[#allocation9 + $0x38] sm:$0xff]
          %v764 = vld [vmem:[#allocation9 + $0x40] sm:$0xff]
          %v765 = vld [vmem:[#allocation9 + $0x48] sm:$0xff]
          %v766 = vld [vmem:[#allocation9 + $0x50] sm:$0xff]
          %v767 = vld [vmem:[#allocation9 + $0x58] sm:$0xff]
          %v768 = vld [vmem:[#allocation9 + $0x60] sm:$0xff]
          %v769 = vld [vmem:[#allocation9 + $0x68] sm:$0xff]
          %v770 = vld [vmem:[#allocation9 + $0x70] sm:$0xff]
          %v771 = vld [vmem:[#allocation9 + $0x78] sm:$0xff]
          %v772 = vld [vmem:[#allocation10] sm:$0xff]
          %v773 = vld [vmem:[#allocation10 + $0x8] sm:$0xff]
          %v774 = vld [vmem:[#allocation10 + $0x10] sm:$0xff]
          %v775 = vld [vmem:[#allocation10 + $0x18] sm:$0xff]
          %v776 = vld [vmem:[#allocation10 + $0x20] sm:$0xff]
          %v777 = vld [vmem:[#allocation10 + $0x28] sm:$0xff]
          %v778 = vld [vmem:[#allocation10 + $0x30] sm:$0xff]
          %v779 = vld [vmem:[#allocation10 + $0x38] sm:$0xff]
          %v780 = vld [vmem:[#allocation10 + $0x40] sm:$0xff]
          %v781 = vld [vmem:[#allocation10 + $0x48] sm:$0xff]
          %v782 = vld [vmem:[#allocation10 + $0x50] sm:$0xff]
          %v783 = vld [vmem:[#allocation10 + $0x58] sm:$0xff]
          %v784 = vld [vmem:[#allocation10 + $0x60] sm:$0xff]
          %v785 = vld [vmem:[#allocation10 + $0x68] sm:$0xff]
          %v786 = vld [vmem:[#allocation10 + $0x70] sm:$0xff]
          %v787 = vld [vmem:[#allocation10 + $0x78] sm:$0xff]
          %788 = vmatprep.subr.mxu0 0.0
          %789 = vmatpush1.msra.mxu0 %v772
          %790 = vmatprep.subr.mxu0 0.0
          %791 = vmatpush1.msra.mxu0 %v773
          %792 = vmatprep.subr.mxu0 0.0
          %793 = vmatpush1.msra.mxu0 %v774
          %794 = vmatprep.subr.mxu0 0.0
          %795 = vmatpush1.msra.mxu0 %v775
          %796 = vmatprep.subr.mxu0 0.0
          %797 = vmatpush1.msra.mxu0 %v776
          %798 = vmatprep.subr.mxu0 0.0
          %799 = vmatpush1.msra.mxu0 %v777
          %800 = vmatprep.subr.mxu0 0.0
          %801 = vmatpush1.msra.mxu0 %v778
          %802 = vmatprep.subr.mxu0 0.0
          %803 = vmatpush1.msra.mxu0 %v779
          %804 = vmatprep.subr.mxu0 0.0
          %805 = vmatpush1.msra.mxu0 %v780
          %806 = vmatprep.subr.mxu0 0.0
          %807 = vmatpush1.msra.mxu0 %v781
          %808 = vmatprep.subr.mxu0 0.0
          %809 = vmatpush1.msra.mxu0 %v782
          %810 = vmatprep.subr.mxu0 0.0
          %811 = vmatpush1.msra.mxu0 %v783
          %812 = vmatprep.subr.mxu0 0.0
          %813 = vmatpush1.msra.mxu0 %v784
          %814 = vmatprep.subr.mxu0 0.0
          %815 = vmatpush1.msra.mxu0 %v785
          %816 = vmatprep.subr.mxu0 0.0
          %817 = vmatpush1.msra.mxu0 %v786
          %818 = vmatprep.subr.mxu0 0.0
          %819 = vmatpush1.msra.mxu0 %v787
          %820 = vmatprep.subr.mxu0 0.0
          %821 = vmatpush1.msra.mxu0 0.0
          %822 = vmatprep.subr.mxu0 0.0
          %823 = vmatpush1.msra.mxu0 0.0
          %824 = vmatprep.subr.mxu0 0.0
          %825 = vmatpush1.msra.mxu0 0.0
          %826 = vmatprep.subr.mxu0 0.0
          %827 = vmatpush1.msra.mxu0 0.0
          %828 = vmatprep.subr.mxu0 0.0
          %829 = vmatpush1.msra.mxu0 0.0
          %830 = vmatprep.subr.mxu0 0.0
          %831 = vmatpush1.msra.mxu0 0.0
          %832 = vmatprep.subr.mxu0 0.0
          %833 = vmatpush1.msra.mxu0 0.0
          %834 = vmatprep.subr.mxu0 0.0
          %835 = vmatpush1.msra.mxu0 0.0
          %836 = vmatprep.subr.mxu0 0.0
          %837 = vmatpush1.msra.mxu0 0.0
          %838 = vmatprep.subr.mxu0 0.0
          %839 = vmatpush1.msra.mxu0 0.0
          %840 = vmatprep.subr.mxu0 0.0
          %841 = vmatpush1.msra.mxu0 0.0
          %842 = vmatprep.subr.mxu0 0.0
          %843 = vmatpush1.msra.mxu0 0.0
          %844 = vmatprep.subr.mxu0 0.0
          %845 = vmatpush1.msra.mxu0 0.0
          %846 = vmatprep.subr.mxu0 0.0
          %847 = vmatpush1.msra.mxu0 0.0
          %848 = vmatprep.subr.mxu0 0.0
          %849 = vmatpush1.msra.mxu0 0.0
          %850 = vmatprep.subr.mxu0 0.0
          %851 = vmatpush1.msra.mxu0 0.0
          %852 = vmatprep.mubr.f32.mxu0 0.0
          %853 = vmatmul.mubr.f32.gmra.mrb[0].mxu0 %v740
          %v854 = vpop.f32.mrb[0].mxu0
          %v855 = vadd.f32 0.0, %v854
          %v856 = vpop.f32.mrb[0].mxu0
          %857 = vmatprep.mubr.f32.mxu0 0.0
          %858 = vmatmul.mubr.f32.gmra.mrb[0].mxu0 %v741
          %v859 = vpop.f32.mrb[0].mxu0
          %v860 = vadd.f32 0.0, %v859
          %v861 = vpop.f32.mrb[0].mxu0
          %862 = vmatprep.mubr.f32.mxu0 0.0
          %863 = vmatmul.mubr.f32.gmra.mrb[0].mxu0 %v742
          %v864 = vpop.f32.mrb[0].mxu0
          %v865 = vadd.f32 0.0, %v864
          %v866 = vpop.f32.mrb[0].mxu0
          %867 = vmatprep.mubr.f32.mxu0 0.0
          %868 = vmatmul.mubr.f32.gmra.mrb[0].mxu0 %v743
          %v869 = vpop.f32.mrb[0].mxu0
          %v870 = vadd.f32 0.0, %v869
          %v871 = vpop.f32.mrb[0].mxu0
          %872 = vmatprep.mubr.f32.mxu0 0.0
          %873 = vmatmul.mubr.f32.gmra.mrb[0].mxu0 %v744
          %v874 = vpop.f32.mrb[0].mxu0
          %v875 = vadd.f32 0.0, %v874
          %v876 = vpop.f32.mrb[0].mxu0
          %877 = vmatprep.mubr.f32.mxu0 0.0
          %878 = vmatmul.mubr.f32.gmra.mrb[0].mxu0 %v745
          %v879 = vpop.f32.mrb[0].mxu0
          %v880 = vadd.f32 0.0, %v879
          %v881 = vpop.f32.mrb[0].mxu0
          %882 = vmatprep.mubr.f32.mxu0 0.0
          %883 = vmatmul.mubr.f32.gmra.mrb[0].mxu0 %v746
          %v884 = vpop.f32.mrb[0].mxu0
          %v885 = vadd.f32 0.0, %v884
          %v886 = vpop.f32.mrb[0].mxu0
          %887 = vmatprep.mubr.f32.mxu0 0.0
          %888 = vmatmul.mubr.f32.gmra.mrb[0].mxu0 %v747
          %v889 = vpop.f32.mrb[0].mxu0
          %v890 = vadd.f32 0.0, %v889
          %v891 = vpop.f32.mrb[0].mxu0
          %892 = vdwg.mxu0
          %893 = vmatprep.subr.mxu0 0.0
          %894 = vmatpush1.msra.mxu0 %v756
          %895 = vmatprep.subr.mxu0 0.0
          %896 = vmatpush1.msra.mxu0 %v757
          %897 = vmatprep.subr.mxu0 0.0
          %898 = vmatpush1.msra.mxu0 %v758
          %899 = vmatprep.subr.mxu0 0.0
          %900 = vmatpush1.msra.mxu0 %v759
          %901 = vmatprep.subr.mxu0 0.0
          %902 = vmatpush1.msra.mxu0 %v760
          %903 = vmatprep.subr.mxu0 0.0
          %904 = vmatpush1.msra.mxu0 %v761
          %905 = vmatprep.subr.mxu0 0.0
          %906 = vmatpush1.msra.mxu0 %v762
          %907 = vmatprep.subr.mxu0 0.0
          %908 = vmatpush1.msra.mxu0 %v763
          %909 = vmatprep.subr.mxu0 0.0
          %910 = vmatpush1.msra.mxu0 %v764
          %911 = vmatprep.subr.mxu0 0.0
          %912 = vmatpush1.msra.mxu0 %v765
          %913 = vmatprep.subr.mxu0 0.0
          %914 = vmatpush1.msra.mxu0 %v766
          %915 = vmatprep.subr.mxu0 0.0
          %916 = vmatpush1.msra.mxu0 %v767
          %917 = vmatprep.subr.mxu0 0.0
          %918 = vmatpush1.msra.mxu0 %v768
          %919 = vmatprep.subr.mxu0 0.0
          %920 = vmatpush1.msra.mxu0 %v769
          %921 = vmatprep.subr.mxu0 0.0
          %922 = vmatpush1.msra.mxu0 %v770
          %923 = vmatprep.subr.mxu0 0.0
          %924 = vmatpush1.msra.mxu0 %v771
          %925 = vmatprep.subr.mxu0 0.0
          %926 = vmatpush1.msra.mxu0 0.0
          %927 = vmatprep.subr.mxu0 0.0
          %928 = vmatpush1.msra.mxu0 0.0
          %929 = vmatprep.subr.mxu0 0.0
          %930 = vmatpush1.msra.mxu0 0.0
          %931 = vmatprep.subr.mxu0 0.0
          %932 = vmatpush1.msra.mxu0 0.0
          %933 = vmatprep.subr.mxu0 0.0
          %934 = vmatpush1.msra.mxu0 0.0
          %935 = vmatprep.subr.mxu0 0.0
          %936 = vmatpush1.msra.mxu0 0.0
          %937 = vmatprep.subr.mxu0 0.0
          %938 = vmatpush1.msra.mxu0 0.0
          %939 = vmatprep.subr.mxu0 0.0
          %940 = vmatpush1.msra.mxu0 0.0
          %941 = vmatprep.subr.mxu0 0.0
          %942 = vmatpush1.msra.mxu0 0.0
          %943 = vmatprep.subr.mxu0 0.0
          %944 = vmatpush1.msra.mxu0 0.0
          %945 = vmatprep.subr.mxu0 0.0
          %946 = vmatpush1.msra.mxu0 0.0
          %947 = vmatprep.subr.mxu0 0.0
          %948 = vmatpush1.msra.mxu0 0.0
          %949 = vmatprep.subr.mxu0 0.0
          %950 = vmatpush1.msra.mxu0 0.0
          %951 = vmatprep.subr.mxu0 0.0
          %952 = vmatpush1.msra.mxu0 0.0
          %953 = vmatprep.subr.mxu0 0.0
          %954 = vmatpush1.msra.mxu0 0.0
          %955 = vmatprep.subr.mxu0 0.0
          %956 = vmatpush1.msra.mxu0 0.0
          %957 = vmatprep.mubr.f32.mxu0 0.0
          %958 = vmatmul.mubr.f32.gmra.mrb[0].mxu0 %v748
          %v959 = vpop.f32.mrb[0].mxu0
          %v960 = vadd.f32 %v855, %v959
          %v961 = vpop.f32.mrb[0].mxu0
          %962 = vmatprep.mubr.f32.mxu0 0.0
          %963 = vmatmul.mubr.f32.gmra.mrb[0].mxu0 %v749
          %v964 = vpop.f32.mrb[0].mxu0
          %v965 = vadd.f32 %v860, %v964
          %v966 = vpop.f32.mrb[0].mxu0
          %967 = vmatprep.mubr.f32.mxu0 0.0
          %968 = vmatmul.mubr.f32.gmra.mrb[0].mxu0 %v750
          %v969 = vpop.f32.mrb[0].mxu0
          %v970 = vadd.f32 %v865, %v969
          %v971 = vpop.f32.mrb[0].mxu0
          %972 = vmatprep.mubr.f32.mxu0 0.0
          %973 = vmatmul.mubr.f32.gmra.mrb[0].mxu0 %v751
          %v974 = vpop.f32.mrb[0].mxu0
          %v975 = vadd.f32 %v870, %v974
          %v976 = vpop.f32.mrb[0].mxu0
          %977 = vmatprep.mubr.f32.mxu0 0.0
          %978 = vmatmul.mubr.f32.gmra.mrb[0].mxu0 %v752
          %v979 = vpop.f32.mrb[0].mxu0
          %v980 = vadd.f32 %v875, %v979
          %v981 = vpop.f32.mrb[0].mxu0
          %982 = vmatprep.mubr.f32.mxu0 0.0
          %983 = vmatmul.mubr.f32.gmra.mrb[0].mxu0 %v753
          %v984 = vpop.f32.mrb[0].mxu0
          %v985 = vadd.f32 %v880, %v984
          %v986 = vpop.f32.mrb[0].mxu0
          %987 = vmatprep.mubr.f32.mxu0 0.0
          %988 = vmatmul.mubr.f32.gmra.mrb[0].mxu0 %v754
          %v989 = vpop.f32.mrb[0].mxu0
          %v990 = vadd.f32 %v885, %v989
          %v991 = vpop.f32.mrb[0].mxu0
          %992 = vmatprep.mubr.f32.mxu0 0.0
          %993 = vmatmul.mubr.f32.gmra.mrb[0].mxu0 %v755
          %v994 = vpop.f32.mrb[0].mxu0
          %v995 = vadd.f32 %v890, %v994
          %v996 = vpop.f32.mrb[0].mxu0
          %997 = vdwg.mxu0
          %v998 = vld [vmem:[%s6] sm:$0x1]
          %v1000 = vlaneseq
          %v1001 = vshrl.u32 %v1000, 7
          %v1002 = vsub.s32 0, %v1001
          %v1003 = vrot.slane %v998, %v1002
          %v1005 = vadd.f32 %v960, %v1003
          %v1006 = vadd.f32 %v965, %v1003
          %v1007 = vadd.f32 %v970, %v1003
          %v1008 = vadd.f32 %v975, %v1003
          %v1009 = vadd.f32 %v980, %v1003
          %v1010 = vadd.f32 %v985, %v1003
          %v1011 = vadd.f32 %v990, %v1003
          %v1012 = vadd.f32 %v995, %v1003
          %v1013 = vmax.f32 %v1005, 0.0
          %v1014 = vmax.f32 %v1006, 0.0
          %v1015 = vmax.f32 %v1007, 0.0
          %v1016 = vmax.f32 %v1008, 0.0
          %v1017 = vmax.f32 %v1009, 0.0
          %v1018 = vmax.f32 %v1010, 0.0
          %v1019 = vmax.f32 %v1011, 0.0
          %v1020 = vmax.f32 %v1012, 0.0
          %1021 = vst [vmem:[%s487] sm:$0xff] %v1013
          %1022 = vst [vmem:[%s487 + $0x8] sm:$0xff] %v1014
          %1023 = vst [vmem:[%s487 + $0x10] sm:$0xff] %v1015
          %1024 = vst [vmem:[%s487 + $0x18] sm:$0xff] %v1016
          %1025 = vst [vmem:[%s487 + $0x20] sm:$0xff] %v1017
          %1026 = vst [vmem:[%s487 + $0x28] sm:$0xff] %v1018
          %1027 = vst [vmem:[%s487 + $0x30] sm:$0xff] %v1019
          %1028 = vst [vmem:[%s487 + $0x38] sm:$0xff] %v1020
        $region113: #{tpu_custom_call.1} parent=84 // pred_fallthru
          _
        %s1029 = sand.u32 %s217, 1
        %s1030 = scalar_lea.sflag [#allocation6], %s1029
        %s1031 = sand.u32 %s217, 1
        %s1032 = smul.addr %s1031, 64
        %s1033 = scalar_lea.vmem [#allocation12], %s1032
        // Predicated region
        $region114: #{tpu_custom_call.1} parent=84 // pred_check
          %p1034 = pneg %p227
        $region115: #{tpu_custom_call.1} parent=84 // pred_check_branch
          %1036 = sbr.rel (%p1034) target = $region117
        $region116: #{tpu_custom_call.1} parent=84 // pred_region
          %s1037 = smul.u32 8, %s32
          %s1039 = ssub.s32 1024, 1024
          %1040 = vsyncadd %s1030, %s1039
          %s1041 = smul.addr %s1037, 128
          %s1042 = scalar_lea.hbm %s7, %s1041
          %s1043 = sshll.u32 %s1033, 4
          %s1044 = int_to_ptr.vmem [resolvable:$true] %s1043
          %1049 = dma.vmem_to_hbm [thread:$0]  %s1044, 1024, %s1042, %s1030, 128, 128, 8
        $region117: #{tpu_custom_call.1} parent=84 // pred_fallthru
          _
      $region85: #{tpu_custom_call.1} parent=5 // pred_fallthru
        _
      %p1050 = scmp.le.s32.totalorder 2, %s23
      // Predicated region
      $region118: #{tpu_custom_call.1} parent=5 // pred_check
        %p1051 = pneg %p1050
      $region119: #{tpu_custom_call.1} parent=5 // pred_check_branch
        %1053 = sbr.rel (%p1051) target = $region121
      $region120: #{tpu_custom_call.1} parent=5 // pred_region
        %s1054 = ssub.s32 %s23, 2
        // Predicated region
        $region122: #{tpu_custom_call.1} parent=120 // pred_check
          %p1055 = pneg %p233
        $region123: #{tpu_custom_call.1} parent=120 // pred_check_branch
          %1057 = sbr.rel (%p1055) target = $region125
        $region124: #{tpu_custom_call.1} parent=120 // pred_region
          %s1058 = sand.u32 %s218, 1
          %s1059 = scalar_lea.sflag [#allocation6], %s1058
          %s1060 = sand.u32 %s218, 1
          %s1061 = smul.addr %s1060, 64
          %s1062 = scalar_lea.vmem [#allocation12], %s1061
          %1063 = dma.done %s1059, 1024
        $region125: #{tpu_custom_call.1} parent=120 // pred_fallthru
          _
      $region121: #{tpu_custom_call.1} parent=5 // pred_fallthru
        _
    $region6: #{tpu_custom_call.1} parent=1 // loop_footer
      %s27 = sadd.s32 1, %s23
    $region7: #{tpu_custom_call.1} parent=1 // loop_footer_branch
      %22 = sbr.rel target = $region3
    $region8: #{tpu_custom_call.1} parent=1 // loop_exit
      _
    %1064 = vsyncpa [#allocation5], 1
    %s1065 = scalar_lea.sflag [#allocation5], 1
    %1066 = vsyncpa %s1065, 1
    %1067 = vsyncpa [#allocation8], 1
    %s1068 = scalar_lea.sflag [#allocation8], 1
    %1069 = vsyncpa %s1068, 1
    %1070 = vsyncpa [#allocation11], 1
    %1071 = vsyncpa [#allocation6], 1
    %s1072 = scalar_lea.sflag [#allocation6], 1
    %1073 = vsyncpa %s1072, 1

</llo_original>
